<compile_context>
chip_gen: v6e
topology: v6e:2x2x1
jax: 0.10.0
libtpu: 0.0.40
codegen_flags: <defaults>
</compile_context>

<pallas_src>
import functools
import math

import jax
import jax.numpy as jnp
from jax.experimental import pallas as pl
from jax.experimental.pallas import tpu as pltpu


def _timestep_embedder_kernel(t_ref, w1_ref, b1_ref, w2_ref, b2_ref, out_ref,
                              *, half, max_period):
    # t_ref:  (TILE_N, 1) f32 ; w1_ref: (F, H) bf16 ; b1_ref: (1, H) f32
    # w2_ref: (H, H) bf16     ; b2_ref: (1, H) f32  ; out_ref: (TILE_N, H)
    t = t_ref[...]                                             # (TILE_N, 1)

    # Full [cos|sin] embedding in one transcendental pass (no lane concat):
    #   emb[:, j]        = cos(t * freq_j)                       j <  half
    #   emb[:, half + j] = sin(t * freq_j) = cos(t * freq_j - pi/2)
    col = jax.lax.broadcasted_iota(jnp.int32, (1, 2 * half), 1)
    k = jnp.where(col < half, col, col - half).astype(jnp.float32)
    freqs = jnp.exp(k * (-math.log(max_period) / half))        # (1, F), EUP
    phase = jnp.where(col < half, 0.0, -0.5 * math.pi)         # (1, F)
    emb = jnp.cos(t * freqs + phase).astype(jnp.bfloat16)      # (TILE_N, F)

    # Linear 1: single K=F MXU matmul with f32 accumulation, then bias.
    h = jnp.dot(emb, w1_ref[...], preferred_element_type=jnp.float32)
    h = h + b1_ref[...]

    # SiLU: x * sigmoid(x); exp and the approx reciprocal stay on the EUP slot.
    h = h * pl.reciprocal(1.0 + jnp.exp(-h), approx=True)

    # Linear 2 + bias.
    out = jnp.dot(h.astype(jnp.bfloat16), w2_ref[...],
                  preferred_element_type=jnp.float32)
    out_ref[...] = (out + b2_ref[...]).astype(out_ref.dtype)


def prepare_timestep_embedder_params(w1, b1, w2, b2):
    """One-time weight conversion (bf16 cast + bias reshape).

    Call once at model init and reuse across steps so the per-step hot path
    performs no weight casting / slicing (which would otherwise re-read the
    f32 weights from HBM on every invocation)."""
    hidden = w1.shape[1]
    return (w1.astype(jnp.bfloat16),
            b1.reshape(1, hidden).astype(jnp.float32),
            w2.astype(jnp.bfloat16),
            b2.reshape(1, hidden).astype(jnp.float32))


def sinusoidal_timestep_embedder(t, params, *, frequency_embedding_size=256,
                                 max_period=10000, tile_n=256,
                                 out_dtype=jnp.float32):
    """t: (N,) float timesteps; params: prepare_timestep_embedder_params(...).

    Returns (N, hidden_size) in `out_dtype` (pass jnp.bfloat16 if the consumer
    takes bf16 to halve output VMEM / HBM writeback)."""
    w1, b1, w2, b2 = params
    n = t.shape[0]
    f = frequency_embedding_size
    half = f // 2
    hidden = w1.shape[1]
    assert f % 2 == 0, "frequency_embedding_size must be even"
    # TODO(synk): odd-`dim` zero-pad branch of timestep_embedding not
    # implemented (module default F=256 is even).
    assert w1.shape == (f, hidden)

    # Pad the batch to a multiple of 16 (bf16 sublane packing). Small batches
    # run as a single grid step; larger ones tile at `tile_n` rows per step.
    n16 = -(-n // 16) * 16
    if n16 <= 512:
        tile = n16
    else:
        tile = max(16, (min(tile_n, 512) // 16) * 16)
    n_pad = pl.cdiv(n16, tile) * tile
    grid_steps = n_pad // tile
    # "parallel" only helps (v7x megacore) when there is more than one grid
    # step; with a single step it would just duplicate weight DMA per core.
    semantics = ("parallel",) if grid_steps >= 2 else ("arbitrary",)

    t_pad = jnp.zeros((n_pad, 1), jnp.float32).at[:n, 0].set(
        t.astype(jnp.float32))

    # Scoped VMEM: default pipelining double-buffers every operand; raise the
    # limit only when the true footprint exceeds the most conservative default.
    weight_bytes = f * hidden * 2 + hidden * hidden * 2 + 2 * hidden * 4
    io_bytes = tile * 4 + tile * hidden * jnp.dtype(out_dtype).itemsize
    footprint = 2 * (weight_bytes + io_bytes) + (4 << 20)  # + intermediates slack
    vmem_limit = None
    if footprint > (16 << 20):
        vmem_limit = int(min(footprint, 60 << 20))  # stay under v7x 64 MiB physical

    kernel = functools.partial(_timestep_embedder_kernel,
                               half=half, max_period=max_period)
    resident = lambda shape: pl.BlockSpec(shape, lambda i: (0, 0))

    out = pl.pallas_call(
        kernel,
        out_shape=jax.ShapeDtypeStruct((n_pad, hidden), out_dtype),
        grid=(grid_steps,),
        in_specs=[
            pl.BlockSpec((tile, 1), lambda i: (i, 0)),   # timesteps (tiled)
            resident((f, hidden)),                       # W1 (VMEM-resident)
            resident((1, hidden)),                       # b1
            resident((hidden, hidden)),                  # W2
            resident((1, hidden)),                       # b2
        ],
        out_specs=pl.BlockSpec((tile, hidden), lambda i: (i, 0)),
        compiler_params=pltpu.CompilerParams(
            dimension_semantics=semantics,
            vmem_limit_bytes=vmem_limit),
    )(t_pad, w1, b1, w2, b2)
    return out[:n]


def _reference(t, w1, b1, w2, b2, f=256, max_period=10000):
    half = f // 2
    freqs = jnp.exp(
        -math.log(max_period) * jnp.arange(half, dtype=jnp.float32) / half)
    args = t.astype(jnp.float32)[:, None] * freqs[None, :]
    emb = jnp.concatenate([jnp.cos(args), jnp.sin(args)], axis=-1)
    h = emb @ w1 + b1
    h = h * jax.nn.sigmoid(h)
    return h @ w2 + b2


if __name__ == "__main__":
    N = 8                 # batch of timesteps
    F = 256               # frequency_embedding_size (module default)
    H = 128               # hidden_size (small, lane-aligned)

    key = jax.random.PRNGKey(0)
    k_t, k_w1, k_b1, k_w2, k_b2 = jax.random.split(key, 5)

    # Deterministic synthetic parameters (math layout: W1 (F, H), W2 (H, H)).
    t = jax.random.uniform(k_t, (N,), jnp.float32, 0.0, 1000.0)
    w1 = jax.random.normal(k_w1, (F, H), jnp.float32) * (1.0 / math.sqrt(F))
    b1 = jax.random.normal(k_b1, (H,), jnp.float32) * 0.01
    w2 = jax.random.normal(k_w2, (H, H), jnp.float32) * (1.0 / math.sqrt(H))
    b2 = jax.random.normal(k_b2, (H,), jnp.float32) * 0.01

    # One-time preprocessing (outside the per-step hot path).
    params = jax.block_until_ready(
        prepare_timestep_embedder_params(w1, b1, w2, b2))

    out = sinusoidal_timestep_embedder(t, params, frequency_embedding_size=F)
    out = jax.block_until_ready(out)

    ref = _reference(t, w1, b1, w2, b2, f=F)
    assert out.shape == (N, H), out.shape
    # bf16 matmul operands (f32 accumulation) + approx EUP reciprocal vs. the
    # pure-f32 reference: modestly looser tolerance than an all-f32 compare.
    err = float(jnp.max(jnp.abs(out - ref)))
    assert jnp.allclose(out, ref, atol=3e-2, rtol=3e-2), err

    print("KERNEL_OK")
</pallas_src>

<mosaic_0001>
module attributes {stable_mosaic.version = 11 : i64} {
  func.func @_timestep_embedder_kernel(%arg0: i32, %arg1: memref<16x1xf32, #tpu.memory_space<vmem>>, %arg2: memref<256x128xbf16, #tpu.memory_space<vmem>>, %arg3: memref<1x128xf32, #tpu.memory_space<vmem>>, %arg4: memref<128x128xbf16, #tpu.memory_space<vmem>>, %arg5: memref<1x128xf32, #tpu.memory_space<vmem>>, %arg6: memref<16x128xf32, #tpu.memory_space<vmem>>) attributes {dimension_semantics = [#tpu.dimension_semantics<arbitrary>], iteration_bounds = array<i64: 1>, scalar_prefetch = 0 : i64, scratch_operands = 0 : i64, tpu.core_type = #tpu.core_type<tc>, window_params = [{transform_indices = @transform_0, window_bounds = array<i64: 16, 1>}, {pipeline_mode = #tpu.pipeline_mode<synchronous>, transform_indices = @transform_1, window_bounds = array<i64: 256, 128>}, {pipeline_mode = #tpu.pipeline_mode<synchronous>, transform_indices = @transform_2, window_bounds = array<i64: 1, 128>}, {pipeline_mode = #tpu.pipeline_mode<synchronous>, transform_indices = @transform_3, window_bounds = array<i64: 128, 128>}, {pipeline_mode = #tpu.pipeline_mode<synchronous>, transform_indices = @transform_4, window_bounds = array<i64: 1, 128>}, {transform_indices = @transform_5, window_bounds = array<i64: 16, 128>}]} {
    %c0 = arith.constant 0 : index
    %c0_0 = arith.constant 0 : index
    %0 = vector.load %arg1[%c0, %c0_0] : memref<16x1xf32, #tpu.memory_space<vmem>>, vector<16x1xf32>
    %1 = tpu.iota {dimensions = array<i32: 1>} : vector<1x256xi32>
    %c128_i32 = arith.constant 128 : i32
    %2 = vector.broadcast %c128_i32 : i32 to vector<1x256xi32>
    %3 = arith.cmpi slt, %1, %2 : vector<1x256xi32>
    %c128_i32_1 = arith.constant 128 : i32
    %4 = vector.broadcast %c128_i32_1 : i32 to vector<1x256xi32>
    %5 = arith.subi %1, %4 : vector<1x256xi32>
    %6 = arith.select %3, %1, %5 : vector<1x256xi1>, vector<1x256xi32>
    %7 = arith.sitofp %6 : vector<1x256xi32> to vector<1x256xf32>
    %cst = arith.constant -0.0719557852 : f32
    %8 = vector.broadcast %cst : f32 to vector<1x256xf32>
    %9 = arith.mulf %7, %8 : vector<1x256xf32>
    %10 = math.exp %9 : vector<1x256xf32>
    %c128_i32_2 = arith.constant 128 : i32
    %11 = vector.broadcast %c128_i32_2 : i32 to vector<1x256xi32>
    %12 = arith.cmpi slt, %1, %11 : vector<1x256xi32>
    %cst_3 = arith.constant 0.000000e+00 : f32
    %cst_4 = arith.constant -1.57079637 : f32
    %13 = vector.broadcast %cst_3 : f32 to vector<1x256xf32>
    %14 = vector.broadcast %cst_4 : f32 to vector<1x256xf32>
    %15 = arith.select %12, %13, %14 : vector<1x256xi1>, vector<1x256xf32>
    %16 = vector.broadcast %0 : vector<16x1xf32> to vector<16x256xf32>
    %17 = vector.broadcast %10 : vector<1x256xf32> to vector<16x256xf32>
    %18 = arith.mulf %16, %17 : vector<16x256xf32>
    %19 = vector.broadcast %15 : vector<1x256xf32> to vector<16x256xf32>
    %20 = arith.addf %18, %19 : vector<16x256xf32>
    %21 = math.cos %20 : vector<16x256xf32>
    %22 = arith.truncf %21 : vector<16x256xf32> to vector<16x256xbf16>
    %c0_5 = arith.constant 0 : index
    %c0_6 = arith.constant 0 : index
    %23 = vector.load %arg2[%c0_5, %c0_6] : memref<256x128xbf16, #tpu.memory_space<vmem>>, vector<256x128xbf16>
    %cst_7 = arith.constant dense<0.000000e+00> : vector<16x128xf32>
    %24 = tpu.matmul %22, %23, %cst_7 {dimension_numbers = #tpu.dot_dimension_numbers<[1], [0], [0], [1], [0, 0, 1, 1], [], []>} : vector<16x256xbf16>, vector<256x128xbf16>, vector<16x128xf32> -> vector<16x128xf32>
    %c0_8 = arith.constant 0 : index
    %c0_9 = arith.constant 0 : index
    %25 = vector.load %arg3[%c0_8, %c0_9] : memref<1x128xf32, #tpu.memory_space<vmem>>, vector<1x128xf32>
    %26 = vector.broadcast %25 : vector<1x128xf32> to vector<16x128xf32>
    %27 = arith.addf %24, %26 : vector<16x128xf32>
    %cst_10 = arith.constant 0.000000e+00 : f32
    %28 = vector.broadcast %cst_10 : f32 to vector<16x128xf32>
    %29 = arith.subf %28, %27 : vector<16x128xf32>
    %30 = math.exp %29 : vector<16x128xf32>
    %cst_11 = arith.constant 1.000000e+00 : f32
    %31 = vector.broadcast %cst_11 : f32 to vector<16x128xf32>
    %32 = arith.addf %31, %30 : vector<16x128xf32>
    %33 = tpu.reciprocal %32 {approx = true} : vector<16x128xf32> -> vector<16x128xf32>
    %34 = arith.mulf %27, %33 : vector<16x128xf32>
    %35 = arith.truncf %34 : vector<16x128xf32> to vector<16x128xbf16>
    %c0_12 = arith.constant 0 : index
    %c0_13 = arith.constant 0 : index
    %36 = vector.load %arg4[%c0_12, %c0_13] : memref<128x128xbf16, #tpu.memory_space<vmem>>, vector<128x128xbf16>
    %cst_14 = arith.constant dense<0.000000e+00> : vector<16x128xf32>
    %37 = tpu.matmul %35, %36, %cst_14 {dimension_numbers = #tpu.dot_dimension_numbers<[1], [0], [0], [1], [0, 0, 1, 1], [], []>} : vector<16x128xbf16>, vector<128x128xbf16>, vector<16x128xf32> -> vector<16x128xf32>
    %c0_15 = arith.constant 0 : index
    %c0_16 = arith.constant 0 : index
    %38 = vector.load %arg5[%c0_15, %c0_16] : memref<1x128xf32, #tpu.memory_space<vmem>>, vector<1x128xf32>
    %39 = vector.broadcast %38 : vector<1x128xf32> to vector<16x128xf32>
    %40 = arith.addf %37, %39 : vector<16x128xf32>
    %c0_17 = arith.constant 0 : index
    %c0_18 = arith.constant 0 : index
    %41 = vector.load %arg6[%c0_17, %c0_18] : memref<16x128xf32, #tpu.memory_space<vmem>>, vector<16x128xf32>
    tpu.vector_store %arg6[%c0_17, %c0_18], %40 {strides = array<i32>} : memref<16x128xf32, #tpu.memory_space<vmem>>, vector<16x128xf32>,
    return
  }
  func.func @transform_0(%arg0: i32) -> (i32, i32) {
    %c0_i32 = arith.constant 0 : i32
    %c0_i32_0 = arith.constant 0 : i32
    return %arg0, %c0_i32 : i32, i32
  }
  func.func @transform_1(%arg0: i32) -> (i32, i32) {
    %c0_i32 = arith.constant 0 : i32
    %c0_i32_0 = arith.constant 0 : i32
    %c0_i32_1 = arith.constant 0 : i32
    return %c0_i32, %c0_i32_0 : i32, i32
  }
  func.func @transform_2(%arg0: i32) -> (i32, i32) {
    %c0_i32 = arith.constant 0 : i32
    %c0_i32_0 = arith.constant 0 : i32
    %c0_i32_1 = arith.constant 0 : i32
    return %c0_i32, %c0_i32_0 : i32, i32
  }
  func.func @transform_3(%arg0: i32) -> (i32, i32) {
    %c0_i32 = arith.constant 0 : i32
    %c0_i32_0 = arith.constant 0 : i32
    %c0_i32_1 = arith.constant 0 : i32
    return %c0_i32, %c0_i32_0 : i32, i32
  }
  func.func @transform_4(%arg0: i32) -> (i32, i32) {
    %c0_i32 = arith.constant 0 : i32
    %c0_i32_0 = arith.constant 0 : i32
    %c0_i32_1 = arith.constant 0 : i32
    return %c0_i32, %c0_i32_0 : i32, i32
  }
  func.func @transform_5(%arg0: i32) -> (i32, i32) {
    %c0_i32 = arith.constant 0 : i32
    %c0_i32_0 = arith.constant 0 : i32
    return %arg0, %c0_i32 : i32, i32
  }
}

</mosaic_0001>

<llo_original>
// kernel: tpu_custom_call.1
$region0: #{tpu_custom_call.1}
  #allocation0 [shape = 'u32[]', space=smem, size = 0x4, offset = 0x4, fixed_abs, tag = 'smem constant byte address 0x4 - core index']
  #allocation1 [shape = 'u32[144,128]{1,0:T(1,128)}', space=vmem, size = 0x12000, scoped, tag = 'internal scratch']
  %s0 = inlined_call_operand.vmem [shape: f32[16,1], index: 0, kind: input, shape index: {}]
  %s1 = inlined_call_operand.hbm [shape: bf16[256,128], index: 1, kind: input, shape index: {}]
  %s2 = inlined_call_operand.vmem [shape: f32[1,128], index: 2, kind: input, shape index: {}]
  %s3 = inlined_call_operand.hbm [shape: bf16[128,128], index: 3, kind: input, shape index: {}]
  %s4 = inlined_call_operand.vmem [shape: f32[1,128], index: 4, kind: input, shape index: {}]
  %s5 = inlined_call_operand.hbm [shape: f32[16,128], index: 5, kind: output, shape index: {}]
  %s6 = sld [smem:[#allocation0]]
  $region38: #{tpu_custom_call.1} parent=0
    _
  %s8 = ssub.s32 1, %s6
  %s9 = scalar_select 0, %s8, %s6
  $region1: #{tpu_custom_call.1} parent=0
    #allocation2 [shape = 'u8[65536]{0}', space=vmem, size = 0x10000, scoped, tag = 'input window, operand 1, single buffered']
    #allocation3 [shape = 's32[1]{0}', space=sflag, size = 0x4, scoped, tag = 'scoped memory for tpu_custom_call.1']
    #allocation4 [shape = 's32[1]{0}', space=sflag, size = 0x4, scoped, tag = 'scoped memory for tpu_custom_call.1']
    #allocation5 [shape = 'u8[32768]{0}', space=vmem, size = 0x8000, scoped, tag = 'input window, operand 3, single buffered']
    #allocation6 [shape = 's32[1]{0}', space=sflag, size = 0x4, scoped, tag = 'scoped memory for tpu_custom_call.1']
    #allocation7 [shape = 'u8[8192]{0}', space=vmem, size = 0x2000, scoped, tag = 'output window, operand 0, single buffered']
    %10 = vsyncpa [#allocation3], 0
    %11 = vsyncpa [#allocation6], 0
    %12 = vsyncpa [#allocation4], 0
    // Predicated region
    $region2: #{tpu_custom_call.1} parent=1 // pred_check
      _
    $region3: #{tpu_custom_call.1} parent=1 // pred_check_branch
      %14 = sbr.rel (0) target = $region5
    $region4: #{tpu_custom_call.1} parent=1 // pred_region
      _
    $region5: #{tpu_custom_call.1} parent=1 // pred_fallthru
      _
    // Predicated region
    $region6: #{tpu_custom_call.1} parent=1 // pred_check
      _
    $region7: #{tpu_custom_call.1} parent=1 // pred_check_branch
      %16 = sbr.rel (0) target = $region9
    $region8: #{tpu_custom_call.1} parent=1 // pred_region
      %s18 = ssub.s32 2048, 2048
      %19 = vsyncadd [#allocation3], %s18
      %s20 = sshll.u32 [#allocation2], 4
      %s21 = int_to_ptr.vmem [resolvable:$true] %s20
      %26 = dma.hbm_to_vmem [thread:$0]  %s1, 2048, %s21, [#allocation3], 64, 64, 4
    $region9: #{tpu_custom_call.1} parent=1 // pred_fallthru
      _
    // Predicated region
    $region10: #{tpu_custom_call.1} parent=1 // pred_check
      _
    $region11: #{tpu_custom_call.1} parent=1 // pred_check_branch
      %28 = sbr.rel (0) target = $region13
    $region12: #{tpu_custom_call.1} parent=1 // pred_region
      _
    $region13: #{tpu_custom_call.1} parent=1 // pred_fallthru
      _
    // Predicated region
    $region14: #{tpu_custom_call.1} parent=1 // pred_check
      _
    $region15: #{tpu_custom_call.1} parent=1 // pred_check_branch
      %30 = sbr.rel (0) target = $region17
    $region16: #{tpu_custom_call.1} parent=1 // pred_region
      %s32 = ssub.s32 1024, 1024
      %33 = vsyncadd [#allocation6], %s32
      %s34 = sshll.u32 [#allocation5], 4
      %s35 = int_to_ptr.vmem [resolvable:$true] %s34
      %40 = dma.hbm_to_vmem [thread:$0]  %s3, 1024, %s35, [#allocation6], 64, 64, 4
    $region17: #{tpu_custom_call.1} parent=1 // pred_fallthru
      _
    // Predicated region
    $region18: #{tpu_custom_call.1} parent=1 // pred_check
      _
    $region19: #{tpu_custom_call.1} parent=1 // pred_check_branch
      %42 = sbr.rel (0) target = $region21
    $region20: #{tpu_custom_call.1} parent=1 // pred_region
      _
    $region21: #{tpu_custom_call.1} parent=1 // pred_fallthru
      _
    // Predicated region
    $region22: #{tpu_custom_call.1} parent=1 // pred_check
      _
    $region23: #{tpu_custom_call.1} parent=1 // pred_check_branch
      %44 = sbr.rel (0) target = $region25
    $region24: #{tpu_custom_call.1} parent=1 // pred_region
      %45 = dma.done [#allocation3], 2048
    $region25: #{tpu_custom_call.1} parent=1 // pred_fallthru
      _
    // Predicated region
    $region26: #{tpu_custom_call.1} parent=1 // pred_check
      _
    $region27: #{tpu_custom_call.1} parent=1 // pred_check_branch
      %47 = sbr.rel (0) target = $region29
    $region28: #{tpu_custom_call.1} parent=1 // pred_region
      %48 = dma.done [#allocation6], 1024
    $region29: #{tpu_custom_call.1} parent=1 // pred_fallthru
      _
    %v50 = vld [vmem:[%s0] sm:$0xff]
    %v51 = vld [vmem:[%s0 + $0x8] sm:$0xff]
    %v52 = vlaneseq
    %v53 = vand.u32 %v52, 127
    %v54 = vadd.s32 %v53, 128
    %vm55 = vcmp.lt.s32.totalorder %v53, 128
    %vm56 = vcmp.lt.s32.totalorder %v54, 128
    %v57 = vsub.s32 %v53, 128
    %v58 = vsel %vm55, %v53, %v57
    %v59 = vsel %vm56, %v54, %v53
    %v60 = vcvt.s32.f32 %v58
    %v61 = vcvt.s32.f32 %v59
    %v62 = vmul.f32 %v60, -0.071955785
    %v63 = vmul.f32 %v61, -0.071955785
    %v64 = vmul.f32 %v62, 1.442695
    %v65 = vpow.pop %v64
    %v66 = vmul.f32 %v63, 1.442695
    %v67 = vpow.pop %v66
    %v68 = vsel %vm55, 0.0, -1.5707964
    %v69 = vsel %vm56, 0.0, -1.5707964
    %71 = vset.pattern.permute.xlu0 0
    %72 = vperm.xlu0 %71, %v50
    %v73 = vpop.permute.xlu0 %72
    %76 = vset.pattern.permute.xlu0 0
    %77 = vperm.xlu0 %76, %v51
    %v78 = vpop.permute.xlu0 %77
    %v80 = vmul.f32 %v73, %v65
    %v81 = vmul.f32 %v73, %v67
    %v82 = vmul.f32 %v78, %v65
    %v83 = vmul.f32 %v78, %v67
    %v84 = vadd.f32 %v80, %v68
    %v85 = vadd.f32 %v81, %v69
    %v86 = vadd.f32 %v82, %v68
    %v87 = vadd.f32 %v83, %v69
    %v88 = vand.u32 2147483647, %v84
    %vm89 = vcmp.le.f32.partialorder %v88, 0.7853982
    %vm90 = vcmp.lt.s32.totalorder %v84, 0
    %v91 = vand.u32 %v84, 2139095040
    %v92 = vshrl.u32 %v91, 23
    %v93 = vsub.s32 %v92, 127
    %v94 = vand.u32 2147483647, %v84
    %v95 = vand.u32 %v94, 8388607
    %v96 = vor.u32 %v95, 8388608
    %v97 = vsub.s32 0, %v96
    %v98 = vadd.s32 %v93, 1
    %vm99 = vcmp.gt.s32.totalorder %v98, 0
    %v100 = vsel %vm99, %v98, 0
    %v101 = vshrl.u32 %v100, 5
    %v102 = vand.u32 %v100, 31
    %v103 = vsub.s32 32, %v102
    %v104 = vshrl.u32 683565275, %v103
    %v105 = vshll.u32 683565275, %v102
    %v106 = vshrl.u32 2475754826, %v103
    %v107 = vor.u32 %v105, %v106
    %v108 = vshll.u32 2475754826, %v102
    %v109 = vshrl.u32 2131351028, %v103
    %v110 = vor.u32 %v108, %v109
    %v111 = vshll.u32 2131351028, %v102
    %v112 = vshrl.u32 2102212464, %v103
    %v113 = vor.u32 %v111, %v112
    %v114 = vshll.u32 2102212464, %v102
    %v115 = vshrl.u32 920167782, %v103
    %v116 = vor.u32 %v114, %v115
    %v117 = vshll.u32 920167782, %v102
    %v118 = vshrl.u32 1326507024, %v103
    %v119 = vor.u32 %v117, %v118
    %vm120 = vcmp.lt.s32.totalorder %v101, 1
    %vm121 = vcmp.lt.s32.totalorder %v101, 2
    %vm122 = vcmp.lt.s32.totalorder %v101, 3
    %vm123 = vcmp.lt.s32.totalorder %v101, 4
    %v124 = vsel %vm120, %v104, %v107
    %v125 = vsel %vm123, %v113, 2102212464
    %v126 = vsel %vm122, %v110, %v125
    %v127 = vsel %vm121, %v124, %v126
    %v128 = vsel %vm120, %v107, %v110
    %v129 = vsel %vm123, %v116, 920167782
    %v130 = vsel %vm122, %v113, %v129
    %v131 = vsel %vm121, %v128, %v130
    %v132 = vsel %vm120, %v110, %v113
    %v133 = vsel %vm123, %v119, 1326507024
    %v134 = vsel %vm122, %v116, %v133
    %v135 = vsel %vm121, %v132, %v134
    %v136 = vshll.u32 %v96, 8
    %v137 = vmul.u32.u64.compose %v136, %v135
    %v138 = vextract.low.u32 %v137
    %v139 = vextract.high.u32 %v137
    %v140 = vmul.u32.u64.compose %v136, %v131
    %v141 = vextract.low.u32 %v140
    %v142 = vextract.high.u32 %v140
    %v143 = vmul.u32 %v136, %v127
    %v144 = vadd.s32 %v139, %v141
    %vm145 = vc.u32 %v139, %v141
    %v146 = vadd.s32 %v142, 1
    %v147 = vsel %vm145, %v146, %v142
    %v148 = vadd.s32 %v143, %v147
    %v149 = vadd.s32 %v148, 536870912
    %v150 = vshrl.u32 %v149, 30
    %v151 = vshll.u32 %v150, 30
    %v152 = vsub.s32 %v148, %v151
    %vm153 = vcmp.lt.s32.totalorder %v152, 0
    %v154 = vsub.s32 0, %v152
    %v155 = vsel %vm153, %v154, %v152
    %v156 = vclz %v155
    %v157 = vsub.s32 %v156, 2
    %vm158 = vcmp.gt.s32.totalorder 0, %v157
    %v159 = vsel %vm158, 0, %v157
    %v160 = vsub.s32 32, %v159
    %v161 = vshll.u32 %v152, %v159
    %v162 = vshrl.u32 %v144, %v160
    %v163 = vor.u32 %v161, %v162
    %v164 = vsub.s32 4294967266, %v159
    %v165 = vadd.s32 %v164, 127
    %v166 = vshll.u32 %v165, 23
    %v167 = vor.u32 4788187, %v166
    %v168 = vand.u32 2147483647, %v167
    %v170 = vcvt.s32.f32 %v163
    %v171 = vmul.f32 %v170, %v168
    %v172 = vxor.u32 %v171, 2147483648
    %v173 = vsel %vm90, %v172, %v171
    %v174 = vsub.s32 4, %v150
    %v175 = vsel %vm90, %v174, %v150
    %v176 = vsel %vm89, %v84, %v173
    %v177 = vsel %vm89, 0, %v175
    %v178 = vcosq.f32.pop %v176
    %v179 = vsinq.f32.pop %v176
    %vm180 = vweird.f32 %v84
    %v181 = vand.u32 %v177, 3
    %vm182 = vcmp.lt.s32.totalorder %v181, 2
    %vm183 = vcmp.eq.s32.totalorder %v181, 0
    %v184 = vxor.u32 %v179, 2147483648
    %v185 = vsel %vm183, %v178, %v184
    %vm186 = vcmp.eq.s32.totalorder %v181, 2
    %v187 = vxor.u32 %v178, 2147483648
    %v188 = vsel %vm186, %v187, %v179
    %v189 = vsel %vm182, %v185, %v188
    %v190 = vsel %vm180, nan, %v189
    %v191 = vand.u32 2147483647, %v85
    %vm192 = vcmp.le.f32.partialorder %v191, 0.7853982
    %vm193 = vcmp.lt.s32.totalorder %v85, 0
    %v194 = vand.u32 %v85, 2139095040
    %v195 = vshrl.u32 %v194, 23
    %v196 = vsub.s32 %v195, 127
    %v197 = vand.u32 2147483647, %v85
    %v198 = vand.u32 %v197, 8388607
    %v199 = vor.u32 %v198, 8388608
    %v200 = vsub.s32 0, %v199
    %v201 = vadd.s32 %v196, 1
    %vm202 = vcmp.gt.s32.totalorder %v201, 0
    %v203 = vsel %vm202, %v201, 0
    %v204 = vshrl.u32 %v203, 5
    %v205 = vand.u32 %v203, 31
    %v206 = vsub.s32 32, %v205
    %v207 = vshrl.u32 683565275, %v206
    %v208 = vshll.u32 683565275, %v205
    %v209 = vshrl.u32 2475754826, %v206
    %v210 = vor.u32 %v208, %v209
    %v211 = vshll.u32 2475754826, %v205
    %v212 = vshrl.u32 2131351028, %v206
    %v213 = vor.u32 %v211, %v212
    %v214 = vshll.u32 2131351028, %v205
    %v215 = vshrl.u32 2102212464, %v206
    %v216 = vor.u32 %v214, %v215
    %v217 = vshll.u32 2102212464, %v205
    %v218 = vshrl.u32 920167782, %v206
    %v219 = vor.u32 %v217, %v218
    %v220 = vshll.u32 920167782, %v205
    %v221 = vshrl.u32 1326507024, %v206
    %v222 = vor.u32 %v220, %v221
    %vm223 = vcmp.lt.s32.totalorder %v204, 1
    %vm224 = vcmp.lt.s32.totalorder %v204, 2
    %vm225 = vcmp.lt.s32.totalorder %v204, 3
    %vm226 = vcmp.lt.s32.totalorder %v204, 4
    %v227 = vsel %vm223, %v207, %v210
    %v228 = vsel %vm226, %v216, 2102212464
    %v229 = vsel %vm225, %v213, %v228
    %v230 = vsel %vm224, %v227, %v229
    %v231 = vsel %vm223, %v210, %v213
    %v232 = vsel %vm226, %v219, 920167782
    %v233 = vsel %vm225, %v216, %v232
    %v234 = vsel %vm224, %v231, %v233
    %v235 = vsel %vm223, %v213, %v216
    %v236 = vsel %vm226, %v222, 1326507024
    %v237 = vsel %vm225, %v219, %v236
    %v238 = vsel %vm224, %v235, %v237
    %v239 = vshll.u32 %v199, 8
    %v240 = vmul.u32.u64.compose %v239, %v238
    %v241 = vextract.low.u32 %v240
    %v242 = vextract.high.u32 %v240
    %v243 = vmul.u32.u64.compose %v239, %v234
    %v244 = vextract.low.u32 %v243
    %v245 = vextract.high.u32 %v243
    %v246 = vmul.u32 %v239, %v230
    %v247 = vadd.s32 %v242, %v244
    %vm248 = vc.u32 %v242, %v244
    %v249 = vadd.s32 %v245, 1
    %v250 = vsel %vm248, %v249, %v245
    %v251 = vadd.s32 %v246, %v250
    %v252 = vadd.s32 %v251, 536870912
    %v253 = vshrl.u32 %v252, 30
    %v254 = vshll.u32 %v253, 30
    %v255 = vsub.s32 %v251, %v254
    %vm256 = vcmp.lt.s32.totalorder %v255, 0
    %v257 = vsub.s32 0, %v255
    %v258 = vsel %vm256, %v257, %v255
    %v259 = vclz %v258
    %v260 = vsub.s32 %v259, 2
    %vm261 = vcmp.gt.s32.totalorder 0, %v260
    %v262 = vsel %vm261, 0, %v260
    %v263 = vsub.s32 32, %v262
    %v264 = vshll.u32 %v255, %v262
    %v265 = vshrl.u32 %v247, %v263
    %v266 = vor.u32 %v264, %v265
    %v267 = vsub.s32 4294967266, %v262
    %v268 = vadd.s32 %v267, 127
    %v269 = vshll.u32 %v268, 23
    %v270 = vor.u32 4788187, %v269
    %v271 = vand.u32 2147483647, %v270
    %v273 = vcvt.s32.f32 %v266
    %v274 = vmul.f32 %v273, %v271
    %v275 = vxor.u32 %v274, 2147483648
    %v276 = vsel %vm193, %v275, %v274
    %v277 = vsub.s32 4, %v253
    %v278 = vsel %vm193, %v277, %v253
    %v279 = vsel %vm192, %v85, %v276
    %v280 = vsel %vm192, 0, %v278
    %v281 = vcosq.f32.pop %v279
    %v282 = vsinq.f32.pop %v279
    %vm283 = vweird.f32 %v85
    %v284 = vand.u32 %v280, 3
    %vm285 = vcmp.lt.s32.totalorder %v284, 2
    %vm286 = vcmp.eq.s32.totalorder %v284, 0
    %v287 = vxor.u32 %v282, 2147483648
    %v288 = vsel %vm286, %v281, %v287
    %vm289 = vcmp.eq.s32.totalorder %v284, 2
    %v290 = vxor.u32 %v281, 2147483648
    %v291 = vsel %vm289, %v290, %v282
    %v292 = vsel %vm285, %v288, %v291
    %v293 = vsel %vm283, nan, %v292
    %v294 = vand.u32 2147483647, %v86
    %vm295 = vcmp.le.f32.partialorder %v294, 0.7853982
    %vm296 = vcmp.lt.s32.totalorder %v86, 0
    %v297 = vand.u32 %v86, 2139095040
    %v298 = vshrl.u32 %v297, 23
    %v299 = vsub.s32 %v298, 127
    %v300 = vand.u32 2147483647, %v86
    %v301 = vand.u32 %v300, 8388607
    %v302 = vor.u32 %v301, 8388608
    %v303 = vsub.s32 0, %v302
    %v304 = vadd.s32 %v299, 1
    %vm305 = vcmp.gt.s32.totalorder %v304, 0
    %v306 = vsel %vm305, %v304, 0
    %v307 = vshrl.u32 %v306, 5
    %v308 = vand.u32 %v306, 31
    %v309 = vsub.s32 32, %v308
    %v310 = vshrl.u32 683565275, %v309
    %v311 = vshll.u32 683565275, %v308
    %v312 = vshrl.u32 2475754826, %v309
    %v313 = vor.u32 %v311, %v312
    %v314 = vshll.u32 2475754826, %v308
    %v315 = vshrl.u32 2131351028, %v309
    %v316 = vor.u32 %v314, %v315
    %v317 = vshll.u32 2131351028, %v308
    %v318 = vshrl.u32 2102212464, %v309
    %v319 = vor.u32 %v317, %v318
    %v320 = vshll.u32 2102212464, %v308
    %v321 = vshrl.u32 920167782, %v309
    %v322 = vor.u32 %v320, %v321
    %v323 = vshll.u32 920167782, %v308
    %v324 = vshrl.u32 1326507024, %v309
    %v325 = vor.u32 %v323, %v324
    %vm326 = vcmp.lt.s32.totalorder %v307, 1
    %vm327 = vcmp.lt.s32.totalorder %v307, 2
    %vm328 = vcmp.lt.s32.totalorder %v307, 3
    %vm329 = vcmp.lt.s32.totalorder %v307, 4
    %v330 = vsel %vm326, %v310, %v313
    %v331 = vsel %vm329, %v319, 2102212464
    %v332 = vsel %vm328, %v316, %v331
    %v333 = vsel %vm327, %v330, %v332
    %v334 = vsel %vm326, %v313, %v316
    %v335 = vsel %vm329, %v322, 920167782
    %v336 = vsel %vm328, %v319, %v335
    %v337 = vsel %vm327, %v334, %v336
    %v338 = vsel %vm326, %v316, %v319
    %v339 = vsel %vm329, %v325, 1326507024
    %v340 = vsel %vm328, %v322, %v339
    %v341 = vsel %vm327, %v338, %v340
    %v342 = vshll.u32 %v302, 8
    %v343 = vmul.u32.u64.compose %v342, %v341
    %v344 = vextract.low.u32 %v343
    %v345 = vextract.high.u32 %v343
    %v346 = vmul.u32.u64.compose %v342, %v337
    %v347 = vextract.low.u32 %v346
    %v348 = vextract.high.u32 %v346
    %v349 = vmul.u32 %v342, %v333
    %v350 = vadd.s32 %v345, %v347
    %vm351 = vc.u32 %v345, %v347
    %v352 = vadd.s32 %v348, 1
    %v353 = vsel %vm351, %v352, %v348
    %v354 = vadd.s32 %v349, %v353
    %v355 = vadd.s32 %v354, 536870912
    %v356 = vshrl.u32 %v355, 30
    %v357 = vshll.u32 %v356, 30
    %v358 = vsub.s32 %v354, %v357
    %vm359 = vcmp.lt.s32.totalorder %v358, 0
    %v360 = vsub.s32 0, %v358
    %v361 = vsel %vm359, %v360, %v358
    %v362 = vclz %v361
    %v363 = vsub.s32 %v362, 2
    %vm364 = vcmp.gt.s32.totalorder 0, %v363
    %v365 = vsel %vm364, 0, %v363
    %v366 = vsub.s32 32, %v365
    %v367 = vshll.u32 %v358, %v365
    %v368 = vshrl.u32 %v350, %v366
    %v369 = vor.u32 %v367, %v368
    %v370 = vsub.s32 4294967266, %v365
    %v371 = vadd.s32 %v370, 127
    %v372 = vshll.u32 %v371, 23
    %v373 = vor.u32 4788187, %v372
    %v374 = vand.u32 2147483647, %v373
    %v376 = vcvt.s32.f32 %v369
    %v377 = vmul.f32 %v376, %v374
    %v378 = vxor.u32 %v377, 2147483648
    %v379 = vsel %vm296, %v378, %v377
    %v380 = vsub.s32 4, %v356
    %v381 = vsel %vm296, %v380, %v356
    %v382 = vsel %vm295, %v86, %v379
    %v383 = vsel %vm295, 0, %v381
    %v384 = vcosq.f32.pop %v382
    %v385 = vsinq.f32.pop %v382
    %vm386 = vweird.f32 %v86
    %v387 = vand.u32 %v383, 3
    %vm388 = vcmp.lt.s32.totalorder %v387, 2
    %vm389 = vcmp.eq.s32.totalorder %v387, 0
    %v390 = vxor.u32 %v385, 2147483648
    %v391 = vsel %vm389, %v384, %v390
    %vm392 = vcmp.eq.s32.totalorder %v387, 2
    %v393 = vxor.u32 %v384, 2147483648
    %v394 = vsel %vm392, %v393, %v385
    %v395 = vsel %vm388, %v391, %v394
    %v396 = vsel %vm386, nan, %v395
    %v397 = vand.u32 2147483647, %v87
    %vm398 = vcmp.le.f32.partialorder %v397, 0.7853982
    %vm399 = vcmp.lt.s32.totalorder %v87, 0
    %v400 = vand.u32 %v87, 2139095040
    %v401 = vshrl.u32 %v400, 23
    %v402 = vsub.s32 %v401, 127
    %v403 = vand.u32 2147483647, %v87
    %v404 = vand.u32 %v403, 8388607
    %v405 = vor.u32 %v404, 8388608
    %v406 = vsub.s32 0, %v405
    %v407 = vadd.s32 %v402, 1
    %vm408 = vcmp.gt.s32.totalorder %v407, 0
    %v409 = vsel %vm408, %v407, 0
    %v410 = vshrl.u32 %v409, 5
    %v411 = vand.u32 %v409, 31
    %v412 = vsub.s32 32, %v411
    %v413 = vshrl.u32 683565275, %v412
    %v414 = vshll.u32 683565275, %v411
    %v415 = vshrl.u32 2475754826, %v412
    %v416 = vor.u32 %v414, %v415
    %v417 = vshll.u32 2475754826, %v411
    %v418 = vshrl.u32 2131351028, %v412
    %v419 = vor.u32 %v417, %v418
    %v420 = vshll.u32 2131351028, %v411
    %v421 = vshrl.u32 2102212464, %v412
    %v422 = vor.u32 %v420, %v421
    %v423 = vshll.u32 2102212464, %v411
    %v424 = vshrl.u32 920167782, %v412
    %v425 = vor.u32 %v423, %v424
    %v426 = vshll.u32 920167782, %v411
    %v427 = vshrl.u32 1326507024, %v412
    %v428 = vor.u32 %v426, %v427
    %vm429 = vcmp.lt.s32.totalorder %v410, 1
    %vm430 = vcmp.lt.s32.totalorder %v410, 2
    %vm431 = vcmp.lt.s32.totalorder %v410, 3
    %vm432 = vcmp.lt.s32.totalorder %v410, 4
    %v433 = vsel %vm429, %v413, %v416
    %v434 = vsel %vm432, %v422, 2102212464
    %v435 = vsel %vm431, %v419, %v434
    %v436 = vsel %vm430, %v433, %v435
    %v437 = vsel %vm429, %v416, %v419
    %v438 = vsel %vm432, %v425, 920167782
    %v439 = vsel %vm431, %v422, %v438
    %v440 = vsel %vm430, %v437, %v439
    %v441 = vsel %vm429, %v419, %v422
    %v442 = vsel %vm432, %v428, 1326507024
    %v443 = vsel %vm431, %v425, %v442
    %v444 = vsel %vm430, %v441, %v443
    %v445 = vshll.u32 %v405, 8
    %v446 = vmul.u32.u64.compose %v445, %v444
    %v447 = vextract.low.u32 %v446
    %v448 = vextract.high.u32 %v446
    %v449 = vmul.u32.u64.compose %v445, %v440
    %v450 = vextract.low.u32 %v449
    %v451 = vextract.high.u32 %v449
    %v452 = vmul.u32 %v445, %v436
    %v453 = vadd.s32 %v448, %v450
    %vm454 = vc.u32 %v448, %v450
    %v455 = vadd.s32 %v451, 1
    %v456 = vsel %vm454, %v455, %v451
    %v457 = vadd.s32 %v452, %v456
    %v458 = vadd.s32 %v457, 536870912
    %v459 = vshrl.u32 %v458, 30
    %v460 = vshll.u32 %v459, 30
    %v461 = vsub.s32 %v457, %v460
    %vm462 = vcmp.lt.s32.totalorder %v461, 0
    %v463 = vsub.s32 0, %v461
    %v464 = vsel %vm462, %v463, %v461
    %v465 = vclz %v464
    %v466 = vsub.s32 %v465, 2
    %vm467 = vcmp.gt.s32.totalorder 0, %v466
    %v468 = vsel %vm467, 0, %v466
    %v469 = vsub.s32 32, %v468
    %v470 = vshll.u32 %v461, %v468
    %v471 = vshrl.u32 %v453, %v469
    %v472 = vor.u32 %v470, %v471
    %v473 = vsub.s32 4294967266, %v468
    %v474 = vadd.s32 %v473, 127
    %v475 = vshll.u32 %v474, 23
    %v476 = vor.u32 4788187, %v475
    %v477 = vand.u32 2147483647, %v476
    %v479 = vcvt.s32.f32 %v472
    %v480 = vmul.f32 %v479, %v477
    %v481 = vxor.u32 %v480, 2147483648
    %v482 = vsel %vm399, %v481, %v480
    %v483 = vsub.s32 4, %v459
    %v484 = vsel %vm399, %v483, %v459
    %v485 = vsel %vm398, %v87, %v482
    %v486 = vsel %vm398, 0, %v484
    %v487 = vcosq.f32.pop %v485
    %v488 = vsinq.f32.pop %v485
    %vm489 = vweird.f32 %v87
    %v490 = vand.u32 %v486, 3
    %vm491 = vcmp.lt.s32.totalorder %v490, 2
    %vm492 = vcmp.eq.s32.totalorder %v490, 0
    %v493 = vxor.u32 %v488, 2147483648
    %v494 = vsel %vm492, %v487, %v493
    %vm495 = vcmp.eq.s32.totalorder %v490, 2
    %v496 = vxor.u32 %v487, 2147483648
    %v497 = vsel %vm495, %v496, %v488
    %v498 = vsel %vm491, %v494, %v497
    %v499 = vsel %vm489, nan, %v498
    %v500 = vpack.c.bf16 %v396, %v190
    %v501 = vpack.c.bf16 %v499, %v293
    %v502 = vld [vmem:[#allocation2] sm:$0xf]
    %v503 = vld [vmem:[#allocation2 + $0x4] sm:$0xf]
    %v504 = vld [vmem:[#allocation2 + $0x8] sm:$0xf]
    %v505 = vld [vmem:[#allocation2 + $0xc] sm:$0xf]
    %v506 = vld [vmem:[#allocation2 + $0x10] sm:$0xf]
    %v507 = vld [vmem:[#allocation2 + $0x14] sm:$0xf]
    %v508 = vld [vmem:[#allocation2 + $0x18] sm:$0xf]
    %v509 = vld [vmem:[#allocation2 + $0x1c] sm:$0xf]
    %v510 = vld [vmem:[#allocation2 + $0x20] sm:$0xf]
    %v511 = vld [vmem:[#allocation2 + $0x24] sm:$0xf]
    %v512 = vld [vmem:[#allocation2 + $0x28] sm:$0xf]
    %v513 = vld [vmem:[#allocation2 + $0x2c] sm:$0xf]
    %v514 = vld [vmem:[#allocation2 + $0x30] sm:$0xf]
    %v515 = vld [vmem:[#allocation2 + $0x34] sm:$0xf]
    %v516 = vld [vmem:[#allocation2 + $0x38] sm:$0xf]
    %v517 = vld [vmem:[#allocation2 + $0x3c] sm:$0xf]
    %v518 = vld [vmem:[#allocation2 + $0x40] sm:$0xf]
    %v519 = vld [vmem:[#allocation2 + $0x44] sm:$0xf]
    %v520 = vld [vmem:[#allocation2 + $0x48] sm:$0xf]
    %v521 = vld [vmem:[#allocation2 + $0x4c] sm:$0xf]
    %v522 = vld [vmem:[#allocation2 + $0x50] sm:$0xf]
    %v523 = vld [vmem:[#allocation2 + $0x54] sm:$0xf]
    %v524 = vld [vmem:[#allocation2 + $0x58] sm:$0xf]
    %v525 = vld [vmem:[#allocation2 + $0x5c] sm:$0xf]
    %v526 = vld [vmem:[#allocation2 + $0x60] sm:$0xf]
    %v527 = vld [vmem:[#allocation2 + $0x64] sm:$0xf]
    %v528 = vld [vmem:[#allocation2 + $0x68] sm:$0xf]
    %v529 = vld [vmem:[#allocation2 + $0x6c] sm:$0xf]
    %v530 = vld [vmem:[#allocation2 + $0x70] sm:$0xf]
    %v531 = vld [vmem:[#allocation2 + $0x74] sm:$0xf]
    %v532 = vld [vmem:[#allocation2 + $0x78] sm:$0xf]
    %v533 = vld [vmem:[#allocation2 + $0x7c] sm:$0xf]
    %v534 = vld [vmem:[%s2] sm:$0x1]
    %v536 = vlaneseq
    %v537 = vshrl.u32 %v536, 7
    %v538 = vsub.s32 0, %v537
    %v539 = vrot.slane %v534, %v538
    %v573 = vunpack.c.l.b16 %v502
    %v574 = vunpack.c.l.b16 %v503
    %v575 = vunpack.c.l.b16 %v504
    %v576 = vunpack.c.l.b16 %v505
    %v577 = vunpack.c.l.b16 %v506
    %v578 = vunpack.c.l.b16 %v507
    %v579 = vunpack.c.l.b16 %v508
    %v580 = vunpack.c.l.b16 %v509
    %v581 = vunpack.c.l.b16 %v510
    %v582 = vunpack.c.l.b16 %v511
    %v583 = vunpack.c.l.b16 %v512
    %v584 = vunpack.c.l.b16 %v513
    %v585 = vunpack.c.l.b16 %v514
    %v586 = vunpack.c.l.b16 %v515
    %v587 = vunpack.c.l.b16 %v516
    %v588 = vunpack.c.l.b16 %v517
    %v589 = vunpack.c.l.b16 %v518
    %v590 = vunpack.c.l.b16 %v519
    %v591 = vunpack.c.l.b16 %v520
    %v592 = vunpack.c.l.b16 %v521
    %v593 = vunpack.c.l.b16 %v522
    %v594 = vunpack.c.l.b16 %v523
    %v595 = vunpack.c.l.b16 %v524
    %v596 = vunpack.c.l.b16 %v525
    %v597 = vunpack.c.l.b16 %v526
    %v598 = vunpack.c.l.b16 %v527
    %v599 = vunpack.c.l.b16 %v528
    %v600 = vunpack.c.l.b16 %v529
    %v601 = vunpack.c.l.b16 %v530
    %v602 = vunpack.c.l.b16 %v531
    %v603 = vunpack.c.l.b16 %v532
    %v604 = vunpack.c.l.b16 %v533
    %v605 = vpack.c.b16 %v574, %v573
    %v606 = vpack.c.b16 %v576, %v575
    %v607 = vpack.c.b16 %v578, %v577
    %v608 = vpack.c.b16 %v580, %v579
    %v609 = vpack.c.b16 %v582, %v581
    %v610 = vpack.c.b16 %v584, %v583
    %v611 = vpack.c.b16 %v586, %v585
    %v612 = vpack.c.b16 %v588, %v587
    %v613 = vpack.c.b16 %v590, %v589
    %v614 = vpack.c.b16 %v592, %v591
    %v615 = vpack.c.b16 %v594, %v593
    %v616 = vpack.c.b16 %v596, %v595
    %v617 = vpack.c.b16 %v598, %v597
    %v618 = vpack.c.b16 %v600, %v599
    %v619 = vpack.c.b16 %v602, %v601
    %v620 = vpack.c.b16 %v604, %v603
    %637 = vmatprep.subr.bf16.mxu0 0
    %638 = vmatpush1.bf16.msra.mxu0 %v612
    %639 = vmatprep.subr.bf16.mxu0 0
    %640 = vmatpush1.bf16.msra.mxu0 %v611
    %641 = vmatprep.subr.bf16.mxu0 0
    %642 = vmatpush1.bf16.msra.mxu0 %v610
    %643 = vmatprep.subr.bf16.mxu0 0
    %644 = vmatpush1.bf16.msra.mxu0 %v609
    %645 = vmatprep.subr.bf16.mxu0 0
    %646 = vmatpush1.bf16.msra.mxu0 %v608
    %647 = vmatprep.subr.bf16.mxu0 0
    %648 = vmatpush1.bf16.msra.mxu0 %v607
    %649 = vmatprep.subr.bf16.mxu0 0
    %650 = vmatpush1.bf16.msra.mxu0 %v606
    %651 = vmatprep.subr.bf16.mxu0 0
    %652 = vmatpush1.bf16.msra.mxu0 %v605
    %653 = vmatprep.subr.bf16.mxu0 0
    %654 = vmatpush2.bf16.msra.mxu0 %v620
    %655 = vmatprep.subr.bf16.mxu0 0
    %656 = vmatpush2.bf16.msra.mxu0 %v619
    %657 = vmatprep.subr.bf16.mxu0 0
    %658 = vmatpush2.bf16.msra.mxu0 %v618
    %659 = vmatprep.subr.bf16.mxu0 0
    %660 = vmatpush2.bf16.msra.mxu0 %v617
    %661 = vmatprep.subr.bf16.mxu0 0
    %662 = vmatpush2.bf16.msra.mxu0 %v616
    %663 = vmatprep.subr.bf16.mxu0 0
    %664 = vmatpush2.bf16.msra.mxu0 %v615
    %665 = vmatprep.subr.bf16.mxu0 0
    %666 = vmatpush2.bf16.msra.mxu0 %v614
    %667 = vmatprep.subr.bf16.mxu0 0
    %668 = vmatpush2.bf16.msra.mxu0 %v613
    %669 = vmatprep.mubr.bf16.mxu0 %v501
    %670 = vmatmul.mubr.bf16.gmra.mxu0 %v500
    %v671 = vpop.f32.mrf.mxu0
    %v672 = vadd.f32 %v539, %v671
    %v673 = vpop.f32.mrf.mxu0
    %v674 = vpop.f32.mrf.mxu0
    %v675 = vadd.f32 %v539, %v674
    %v676 = vpop.f32.mrf.mxu0
    %677 = vdwg.mxu0
    %v678 = vsub.f32 0.0, %v672
    %v679 = vsub.f32 0.0, %v675
    %v680 = vmul.f32 %v678, 1.442695
    %v681 = vpow.pop %v680
    %v682 = vmul.f32 %v679, 1.442695
    %v683 = vpow.pop %v682
    %v684 = vadd.f32 %v681, 1.0
    %v685 = vadd.f32 %v683, 1.0
    %v686 = vrcp.pop %v684
    %v687 = vrcp.pop %v685
    %v688 = vmul.f32 %v672, %v686
    %v689 = vmul.f32 %v675, %v687
    %v690 = vpack.c.bf16 %v689, %v688
    %v691 = vld [vmem:[#allocation5] sm:$0xf]
    %v692 = vld [vmem:[#allocation5 + $0x4] sm:$0xf]
    %v693 = vld [vmem:[#allocation5 + $0x8] sm:$0xf]
    %v694 = vld [vmem:[#allocation5 + $0xc] sm:$0xf]
    %v695 = vld [vmem:[#allocation5 + $0x10] sm:$0xf]
    %v696 = vld [vmem:[#allocation5 + $0x14] sm:$0xf]
    %v697 = vld [vmem:[#allocation5 + $0x18] sm:$0xf]
    %v698 = vld [vmem:[#allocation5 + $0x1c] sm:$0xf]
    %v699 = vld [vmem:[#allocation5 + $0x20] sm:$0xf]
    %v700 = vld [vmem:[#allocation5 + $0x24] sm:$0xf]
    %v701 = vld [vmem:[#allocation5 + $0x28] sm:$0xf]
    %v702 = vld [vmem:[#allocation5 + $0x2c] sm:$0xf]
    %v703 = vld [vmem:[#allocation5 + $0x30] sm:$0xf]
    %v704 = vld [vmem:[#allocation5 + $0x34] sm:$0xf]
    %v705 = vld [vmem:[#allocation5 + $0x38] sm:$0xf]
    %v706 = vld [vmem:[#allocation5 + $0x3c] sm:$0xf]
    %v707 = vld [vmem:[%s4] sm:$0x1]
    %v709 = vlaneseq
    %v710 = vshrl.u32 %v709, 7
    %v711 = vsub.s32 0, %v710
    %v712 = vrot.slane %v707, %v711
    %v730 = vunpack.c.l.b16 %v691
    %v731 = vunpack.c.l.b16 %v692
    %v732 = vunpack.c.l.b16 %v693
    %v733 = vunpack.c.l.b16 %v694
    %v734 = vunpack.c.l.b16 %v695
    %v735 = vunpack.c.l.b16 %v696
    %v736 = vunpack.c.l.b16 %v697
    %v737 = vunpack.c.l.b16 %v698
    %v738 = vunpack.c.l.b16 %v699
    %v739 = vunpack.c.l.b16 %v700
    %v740 = vunpack.c.l.b16 %v701
    %v741 = vunpack.c.l.b16 %v702
    %v742 = vunpack.c.l.b16 %v703
    %v743 = vunpack.c.l.b16 %v704
    %v744 = vunpack.c.l.b16 %v705
    %v745 = vunpack.c.l.b16 %v706
    %v746 = vpack.c.b16 %v731, %v730
    %v747 = vpack.c.b16 %v733, %v732
    %v748 = vpack.c.b16 %v735, %v734
    %v749 = vpack.c.b16 %v737, %v736
    %v750 = vpack.c.b16 %v739, %v738
    %v751 = vpack.c.b16 %v741, %v740
    %v752 = vpack.c.b16 %v743, %v742
    %v753 = vpack.c.b16 %v745, %v744
    %762 = vmatprep.subr.bf16.mxu0 0
    %763 = vmatpush1.bf16.msra.mxu0 %v753
    %764 = vmatprep.subr.bf16.mxu0 0
    %765 = vmatpush1.bf16.msra.mxu0 %v752
    %766 = vmatprep.subr.bf16.mxu0 0
    %767 = vmatpush1.bf16.msra.mxu0 %v751
    %768 = vmatprep.subr.bf16.mxu0 0
    %769 = vmatpush1.bf16.msra.mxu0 %v750
    %770 = vmatprep.subr.bf16.mxu0 0
    %771 = vmatpush1.bf16.msra.mxu0 %v749
    %772 = vmatprep.subr.bf16.mxu0 0
    %773 = vmatpush1.bf16.msra.mxu0 %v748
    %774 = vmatprep.subr.bf16.mxu0 0
    %775 = vmatpush1.bf16.msra.mxu0 %v747
    %776 = vmatprep.subr.bf16.mxu0 0
    %777 = vmatpush1.bf16.msra.mxu0 %v746
    %778 = vmatprep.subr.bf16.mxu0 0
    %779 = vmatpush2.bf16.msra.mxu0 0
    %780 = vmatprep.subr.bf16.mxu0 0
    %781 = vmatpush2.bf16.msra.mxu0 0
    %782 = vmatprep.subr.bf16.mxu0 0
    %783 = vmatpush2.bf16.msra.mxu0 0
    %784 = vmatprep.subr.bf16.mxu0 0
    %785 = vmatpush2.bf16.msra.mxu0 0
    %786 = vmatprep.subr.bf16.mxu0 0
    %787 = vmatpush2.bf16.msra.mxu0 0
    %788 = vmatprep.subr.bf16.mxu0 0
    %789 = vmatpush2.bf16.msra.mxu0 0
    %790 = vmatprep.subr.bf16.mxu0 0
    %791 = vmatpush2.bf16.msra.mxu0 0
    %792 = vmatprep.subr.bf16.mxu0 0
    %793 = vmatpush2.bf16.msra.mxu0 0
    %794 = vmatprep.mubr.bf16.mxu0 0
    %795 = vmatmul.mubr.bf16.gmra.mxu0 %v690
    %v796 = vpop.f32.mrf.mxu0
    %v797 = vadd.f32 %v712, %v796
    %v798 = vpop.f32.mrf.mxu0
    %v799 = vpop.f32.mrf.mxu0
    %v800 = vadd.f32 %v712, %v799
    %v801 = vpop.f32.mrf.mxu0
    %802 = vdwg.mxu0
    %803 = vst [vmem:[#allocation7] sm:$0xff] %v797
    %804 = vst [vmem:[#allocation7 + $0x8] sm:$0xff] %v800
    // Predicated region
    $region30: #{tpu_custom_call.1} parent=1 // pred_check
      _
    $region31: #{tpu_custom_call.1} parent=1 // pred_check_branch
      %806 = sbr.rel (0) target = $region33
    $region32: #{tpu_custom_call.1} parent=1 // pred_region
      %s808 = ssub.s32 256, 256
      %809 = vsyncadd [#allocation4], %s808
      %s810 = sshll.u32 [#allocation7], 4
      %s811 = int_to_ptr.vmem [resolvable:$true] %s810
      %816 = dma.vmem_to_hbm [thread:$0]  %s811, 256, %s5, [#allocation4], 128, 128, 8
    $region33: #{tpu_custom_call.1} parent=1 // pred_fallthru
      _
    // Predicated region
    $region34: #{tpu_custom_call.1} parent=1 // pred_check
      _
    $region35: #{tpu_custom_call.1} parent=1 // pred_check_branch
      %818 = sbr.rel (0) target = $region37
    $region36: #{tpu_custom_call.1} parent=1 // pred_region
      %819 = dma.done [#allocation4], 256
    $region37: #{tpu_custom_call.1} parent=1 // pred_fallthru
      _
    %820 = vsyncpa [#allocation3], 1
    %821 = vsyncpa [#allocation6], 1
    %822 = vsyncpa [#allocation4], 1

</llo_original>
